<compile_context>
chip_gen: v7x
topology: tpu7x:2x2x1
jax: 0.10.0
libtpu: 0.0.40
codegen_flags: <defaults>
</compile_context>

<pallas_src>
import jax
import jax.numpy as jnp
from jax.experimental import pallas as pl
from jax.experimental.pallas import tpu as pltpu


# --------------------------------------------------------------------------
# Kernel
# --------------------------------------------------------------------------
def _make_emd_kernel(B, S, n_cats, has_mask, needs_edge_mask, exact_abs):
    def kernel(*refs):
        if has_mask:
            probs_ref, tgt_ref, mask_ref, num_ref, den_ref = refs
        else:
            probs_ref, tgt_ref, num_ref = refs

        t = tgt_ref[...]
        tb, ts = t.shape
        cum = jnp.zeros((tb, ts), jnp.float32)
        emd = jnp.zeros((tb, ts), jnp.float32)
        for k in range(n_cats):               # static unroll; n_cats is small
            cum = cum + probs_ref[k].astype(jnp.float32)
            if exact_abs:
                emd = emd + jnp.abs(cum - (t <= k).astype(jnp.float32))
            else:
                # Valid when pred_probs are (softmax) probabilities: cum in [0,1].
                emd = emd + jnp.where(t <= k, 1.0 - cum, cum)

        if has_mask:
            w = mask_ref[...].astype(jnp.float32)

        if needs_edge_mask:
            rows_left = B - pl.program_id(0) * tb
            cols_left = S - pl.program_id(1) * ts
            rid = jax.lax.broadcasted_iota(jnp.int32, (tb, ts), 0)
            cid = jax.lax.broadcasted_iota(jnp.int32, (tb, ts), 1)
            valid = (rid < rows_left) & (cid < cols_left)
            # Use where() (not multiply) so NaN/Inf garbage from partial edge
            # blocks can never propagate into the reductions.
            emd = jnp.where(valid, emd, 0.0)
            if has_mask:
                w = jnp.where(valid, w, 0.0)

        if has_mask:
            num_ref[...] = jnp.full(num_ref.shape, jnp.sum(emd * w), jnp.float32)
            den_ref[...] = jnp.full(den_ref.shape, jnp.sum(w), jnp.float32)
        else:
            num_ref[...] = jnp.full(num_ref.shape, jnp.sum(emd), jnp.float32)

    return kernel


# --------------------------------------------------------------------------
# Tile sizing helpers
# --------------------------------------------------------------------------
def _pick_vmem_limit_bytes():
    """Generation-aware scoped-VMEM limit: 64 MiB on v5e/v6e, 32 MiB on v7x."""
    try:
        info = pltpu.get_tpu_info()
        cap = getattr(info, "vmem_capacity_bytes", None)
        if cap:
            return int(min(cap // 2, 64 * 1024 * 1024))
    except Exception:
        pass
    return 32 * 1024 * 1024


def _legal_ts(S, want):
    if S < 128:
        return S                      # full extent (always legal)
    want = int(max(128, min(want, S)))
    return (want // 128) * 128


def _legal_tb(B, want, sub_req):
    if B < sub_req:
        return B                      # full extent (always legal)
    want = int(max(sub_req, min(want, B)))
    return (want // sub_req) * sub_req


def _choose_tiles(B, S, n_cats, itemsizes, vmem_limit, tile_b, tile_s):
    min_item = min(itemsizes)
    sub_req = max(8, 32 // min_item)      # 8 (4-byte), 16 (bf16), 32 (int8)
    p_item = itemsizes[0]
    t_item = itemsizes[1]
    m_item = itemsizes[2] if len(itemsizes) > 2 else 0
    # Double-buffered input tiles + ~6 live f32 temporaries per position.
    per_pos = 2 * (n_cats * p_item + t_item + m_item) + 6 * 4
    budget = max(vmem_limit // 2, 2 * 1024 * 1024)
    max_pos = max(budget // per_pos, 8 * 128)

    ts = _legal_ts(S, tile_s if tile_s is not None else min(S, 8192))
    if tile_b is not None:
        tb = _legal_tb(B, tile_b, sub_req)
    else:
        tb = _legal_tb(B, max(max_pos // max(ts, 1), 1), sub_req)
    if tile_s is None:
        while tb * ts > max_pos and ts > 128:
            ts = _legal_ts(S, ts // 2)

    # Keep >= 2 grid steps for big inputs so both v7x TensorCores get work.
    if tile_b is None and tile_s is None and B * S >= (1 << 18):
        if pl.cdiv(B, tb) * pl.cdiv(S, ts) < 2:
            if S >= 256:
                ts = _legal_ts(S, ts // 2)
            elif B >= 2 * sub_req:
                tb = _legal_tb(B, tb // 2, sub_req)
    return tb, ts


# --------------------------------------------------------------------------
# Public wrapper (matches OrdinalEMDLoss.forward)
# --------------------------------------------------------------------------
def ordinal_emd_loss(pred_probs, targets, mask=None, *, category_major=False,
                     assume_normalized=False, tile_b=None, tile_s=None,
                     vmem_limit_bytes=None):
    """EMD loss for ordinal regression.

    pred_probs: (B, S, K) probabilities, or (K, B, S) if category_major=True
                (i.e. what the producing softmax can emit directly, removing
                the only remaining wrapper-side HBM copy).
    targets:    (B, S) integer categories
    mask:       optional (B, S) float/bool weights
    """
    if category_major:
        probs = pred_probs                               # (K, B, S), no copy
        n_cats = probs.shape[0]
    else:
        n_cats = pred_probs.shape[-1]
        # TODO(synk): ideally the producing softmax emits (K, B, S) directly
        # (pass category_major=True) so this transpose -- the only remaining
        # wrapper-side HBM round trip -- disappears entirely.
        probs = jnp.moveaxis(pred_probs, -1, 0)          # (K, B, S)
    B, S = targets.shape

    has_mask = mask is not None
    if has_mask and mask.dtype == jnp.bool_:
        mask = mask.astype(jnp.float32)

    itemsizes = [jnp.dtype(probs.dtype).itemsize,
                 jnp.dtype(targets.dtype).itemsize]
    if has_mask:
        itemsizes.append(jnp.dtype(mask.dtype).itemsize)

    vmem_limit = (vmem_limit_bytes if vmem_limit_bytes is not None
                  else _pick_vmem_limit_bytes())
    tb, ts = _choose_tiles(B, S, n_cats, itemsizes, vmem_limit, tile_b, tile_s)
    nb, ns = pl.cdiv(B, tb), pl.cdiv(S, ts)
    needs_edge_mask = (B % tb != 0) or (S % ts != 0)

    kernel = _make_emd_kernel(B, S, n_cats, has_mask, needs_edge_mask,
                              exact_abs=not assume_normalized)

    probs_spec = pl.BlockSpec((n_cats, tb, ts), lambda i, j: (0, i, j))
    pos_spec = pl.BlockSpec((tb, ts), lambda i, j: (i, j))
    part_spec = pl.BlockSpec((1, 1, 8, 128), lambda i, j: (i, j, 0, 0))
    part_shape = jax.ShapeDtypeStruct((nb, ns, 8, 128), jnp.float32)
    cparams = pltpu.CompilerParams(
        dimension_semantics=("parallel", "parallel"),
        vmem_limit_bytes=vmem_limit,
    )
    inv_slab = 1.0 / (8 * 128)

    if has_mask:
        num_parts, den_parts = pl.pallas_call(
            kernel,
            out_shape=(part_shape, part_shape),
            grid=(nb, ns),
            in_specs=[probs_spec, pos_spec, pos_spec],
            out_specs=(part_spec, part_spec),
            compiler_params=cparams,
        )(probs, targets, mask)
        num = jnp.sum(num_parts) * inv_slab
        den = jnp.sum(den_parts) * inv_slab
        return num / (den + 1e-7)            # torch: emd.sum()/(mask.sum()+1e-7)

    num_parts = pl.pallas_call(
        kernel,
        out_shape=part_shape,
        grid=(nb, ns),
        in_specs=[probs_spec, pos_spec],
        out_specs=part_spec,
        compiler_params=cparams,
    )(probs, targets)
    return jnp.sum(num_parts) * inv_slab / jnp.float32(B * S)   # torch: emd.mean()


# --------------------------------------------------------------------------
# Pure-JAX reference mirroring the PyTorch forward
# --------------------------------------------------------------------------
def _reference(pred_probs, targets, mask=None):
    K = pred_probs.shape[-1]
    cum_preds = jnp.cumsum(pred_probs.astype(jnp.float32), axis=-1)
    ks = jnp.arange(K)
    cum_targets = (targets[..., None] <= ks).astype(jnp.float32)
    emd = jnp.abs(cum_preds - cum_targets).sum(axis=-1)
    if mask is not None:
        m = mask.astype(jnp.float32)
        return (emd * m).sum() / (m.sum() + 1e-7)
    return emd.mean()


if __name__ == "__main__":
    key = jax.random.PRNGKey(0)

    # --- Small case (module-typical shapes, f32). ---
    B, S, K = 2, 8, 5
    k1, k2, k3, k4 = jax.random.split(key, 4)
    logits = jax.random.normal(k1, (B, S, K), dtype=jnp.float32)
    pred_probs = jax.nn.softmax(logits, axis=-1)
    targets = jax.random.randint(k2, (B, S), 0, K, dtype=jnp.int32)
    mask = (jax.random.uniform(k3, (B, S)) > 0.3).astype(jnp.float32)

    out_u = ordinal_emd_loss(pred_probs, targets)
    jax.block_until_ready(out_u)
    assert jnp.allclose(out_u, _reference(pred_probs, targets),
                        atol=1e-5, rtol=1e-4)

    out_m = ordinal_emd_loss(pred_probs, targets, mask)
    jax.block_until_ready(out_m)
    assert jnp.allclose(out_m, _reference(pred_probs, targets, mask),
                        atol=1e-5, rtol=1e-4)

    # category-major input path (what a fused producing softmax would emit).
    probs_cm = jnp.moveaxis(pred_probs, -1, 0)
    out_cm = ordinal_emd_loss(probs_cm, targets, mask, category_major=True)
    jax.block_until_ready(out_cm)
    assert jnp.allclose(out_cm, _reference(pred_probs, targets, mask),
                        atol=1e-5, rtol=1e-4)

    # trimmed inner loop (valid for normalized softmax probabilities).
    out_fast = ordinal_emd_loss(pred_probs, targets, mask, assume_normalized=True)
    jax.block_until_ready(out_fast)
    assert jnp.allclose(out_fast, _reference(pred_probs, targets, mask),
                        atol=1e-5, rtol=1e-4)

    # --- Medium case: bf16 probs, multi-tile grid, ragged B and S tails. ---
    B2, S2, K2 = 20, 700, 6
    k5, k6, k7 = jax.random.split(k4, 3)
    logits2 = jax.random.normal(k5, (B2, S2, K2), dtype=jnp.float32)
    pred_probs2 = jax.nn.softmax(logits2, axis=-1).astype(jnp.bfloat16)
    targets2 = jax.random.randint(k6, (B2, S2), 0, K2, dtype=jnp.int32)
    mask2 = (jax.random.uniform(k7, (B2, S2)) > 0.5).astype(jnp.float32)

    out2_m = ordinal_emd_loss(pred_probs2, targets2, mask2, tile_b=16, tile_s=256)
    jax.block_until_ready(out2_m)
    ref2_m = _reference(pred_probs2, targets2, mask2)
    assert jnp.allclose(out2_m, ref2_m, atol=1e-3, rtol=1e-3), (out2_m, ref2_m)

    out2_u = ordinal_emd_loss(pred_probs2, targets2, tile_b=16, tile_s=256)
    jax.block_until_ready(out2_u)
    ref2_u = _reference(pred_probs2, targets2)
    assert jnp.allclose(out2_u, ref2_u, atol=1e-3, rtol=1e-3), (out2_u, ref2_u)

    # Auto-chosen tiles (exercises the VMEM-budgeted chooser).
    out2_auto = ordinal_emd_loss(pred_probs2, targets2, mask2)
    jax.block_until_ready(out2_auto)
    assert jnp.allclose(out2_auto, ref2_m, atol=1e-3, rtol=1e-3), (out2_auto, ref2_m)

    print("KERNEL_OK")
</pallas_src>

<mosaic_0001>
module attributes {stable_mosaic.version = 11 : i64} {
  func.func @kernel(%arg0: i32, %arg1: i32, %arg2: memref<5x2x8xf32, #tpu.memory_space<vmem>>, %arg3: memref<2x8xi32, #tpu.memory_space<vmem>>, %arg4: memref<1x1x8x128xf32, #tpu.memory_space<vmem>>) attributes {dimension_semantics = [#tpu.dimension_semantics<parallel>, #tpu.dimension_semantics<parallel>], iteration_bounds = array<i64: 1, 1>, scalar_prefetch = 0 : i64, scratch_operands = 0 : i64, tpu.core_type = #tpu.core_type<tc>, window_params = [{transform_indices = @transform_0, window_bounds = array<i64: 5, 2, 8>}, {transform_indices = @transform_1, window_bounds = array<i64: 2, 8>}, {transform_indices = @transform_2, window_bounds = array<i64: 1, 1, 8, 128>}]} {
    %c0 = arith.constant 0 : index
    %c0_0 = arith.constant 0 : index
    %0 = vector.load %arg3[%c0, %c0_0] : memref<2x8xi32, #tpu.memory_space<vmem>>, vector<2x8xi32>
    %cst = arith.constant 0.000000e+00 : f32
    %1 = vector.broadcast %cst : f32 to vector<2x8xf32>
    %cst_1 = arith.constant 0.000000e+00 : f32
    %2 = vector.broadcast %cst_1 : f32 to vector<2x8xf32>
    %c0_2 = arith.constant 0 : index
    %c0_3 = arith.constant 0 : index
    %c0_4 = arith.constant 0 : index
    %3 = vector.load %arg2[%c0_2, %c0_3, %c0_4] : memref<5x2x8xf32, #tpu.memory_space<vmem>>, vector<1x2x8xf32>
    %4 = vector.shape_cast %3 : vector<1x2x8xf32> to vector<2x8xf32>
    %5 = arith.addf %1, %4 : vector<2x8xf32>
    %c0_i32 = arith.constant 0 : i32
    %6 = vector.broadcast %c0_i32 : i32 to vector<2x8xi32>
    %7 = arith.cmpi sle, %0, %6 : vector<2x8xi32>
    %8 = arith.extui %7 : vector<2x8xi1> to vector<2x8xi32>
    %9 = arith.sitofp %8 : vector<2x8xi32> to vector<2x8xf32>
    %10 = arith.subf %5, %9 : vector<2x8xf32>
    %11 = math.absf %10 : vector<2x8xf32>
    %12 = arith.addf %2, %11 : vector<2x8xf32>
    %c1 = arith.constant 1 : index
    %c0_5 = arith.constant 0 : index
    %c0_6 = arith.constant 0 : index
    %13 = vector.load %arg2[%c1, %c0_5, %c0_6] : memref<5x2x8xf32, #tpu.memory_space<vmem>>, vector<1x2x8xf32>
    %14 = vector.shape_cast %13 : vector<1x2x8xf32> to vector<2x8xf32>
    %15 = arith.addf %5, %14 : vector<2x8xf32>
    %c1_i32 = arith.constant 1 : i32
    %16 = vector.broadcast %c1_i32 : i32 to vector<2x8xi32>
    %17 = arith.cmpi sle, %0, %16 : vector<2x8xi32>
    %18 = arith.extui %17 : vector<2x8xi1> to vector<2x8xi32>
    %19 = arith.sitofp %18 : vector<2x8xi32> to vector<2x8xf32>
    %20 = arith.subf %15, %19 : vector<2x8xf32>
    %21 = math.absf %20 : vector<2x8xf32>
    %22 = arith.addf %12, %21 : vector<2x8xf32>
    %c2 = arith.constant 2 : index
    %c0_7 = arith.constant 0 : index
    %c0_8 = arith.constant 0 : index
    %23 = vector.load %arg2[%c2, %c0_7, %c0_8] : memref<5x2x8xf32, #tpu.memory_space<vmem>>, vector<1x2x8xf32>
    %24 = vector.shape_cast %23 : vector<1x2x8xf32> to vector<2x8xf32>
    %25 = arith.addf %15, %24 : vector<2x8xf32>
    %c2_i32 = arith.constant 2 : i32
    %26 = vector.broadcast %c2_i32 : i32 to vector<2x8xi32>
    %27 = arith.cmpi sle, %0, %26 : vector<2x8xi32>
    %28 = arith.extui %27 : vector<2x8xi1> to vector<2x8xi32>
    %29 = arith.sitofp %28 : vector<2x8xi32> to vector<2x8xf32>
    %30 = arith.subf %25, %29 : vector<2x8xf32>
    %31 = math.absf %30 : vector<2x8xf32>
    %32 = arith.addf %22, %31 : vector<2x8xf32>
    %c3 = arith.constant 3 : index
    %c0_9 = arith.constant 0 : index
    %c0_10 = arith.constant 0 : index
    %33 = vector.load %arg2[%c3, %c0_9, %c0_10] : memref<5x2x8xf32, #tpu.memory_space<vmem>>, vector<1x2x8xf32>
    %34 = vector.shape_cast %33 : vector<1x2x8xf32> to vector<2x8xf32>
    %35 = arith.addf %25, %34 : vector<2x8xf32>
    %c3_i32 = arith.constant 3 : i32
    %36 = vector.broadcast %c3_i32 : i32 to vector<2x8xi32>
    %37 = arith.cmpi sle, %0, %36 : vector<2x8xi32>
    %38 = arith.extui %37 : vector<2x8xi1> to vector<2x8xi32>
    %39 = arith.sitofp %38 : vector<2x8xi32> to vector<2x8xf32>
    %40 = arith.subf %35, %39 : vector<2x8xf32>
    %41 = math.absf %40 : vector<2x8xf32>
    %42 = arith.addf %32, %41 : vector<2x8xf32>
    %c4 = arith.constant 4 : index
    %c0_11 = arith.constant 0 : index
    %c0_12 = arith.constant 0 : index
    %43 = vector.load %arg2[%c4, %c0_11, %c0_12] : memref<5x2x8xf32, #tpu.memory_space<vmem>>, vector<1x2x8xf32>
    %44 = vector.shape_cast %43 : vector<1x2x8xf32> to vector<2x8xf32>
    %45 = arith.addf %35, %44 : vector<2x8xf32>
    %c4_i32 = arith.constant 4 : i32
    %46 = vector.broadcast %c4_i32 : i32 to vector<2x8xi32>
    %47 = arith.cmpi sle, %0, %46 : vector<2x8xi32>
    %48 = arith.extui %47 : vector<2x8xi1> to vector<2x8xi32>
    %49 = arith.sitofp %48 : vector<2x8xi32> to vector<2x8xf32>
    %50 = arith.subf %45, %49 : vector<2x8xf32>
    %51 = math.absf %50 : vector<2x8xf32>
    %52 = arith.addf %42, %51 : vector<2x8xf32>
    %53 = vector.shape_cast %52 : vector<2x8xf32> to vector<1x2x8xf32>
    %cst_13 = arith.constant dense<0.000000e+00> : vector<1xf32>
    %54 = vector.multi_reduction <add>, %53, %cst_13 [1, 2] : vector<1x2x8xf32> to vector<1xf32>
    %55 = vector.shape_cast %54 : vector<1xf32> to vector<1x1x1xf32>
    %56 = vector.extract %55[0, 0, 0] : f32 from vector<1x1x1xf32>
    %57 = vector.broadcast %56 : f32 to vector<1x1x8x128xf32>
    %c0_14 = arith.constant 0 : index
    %c0_15 = arith.constant 0 : index
    %c0_16 = arith.constant 0 : index
    %c0_17 = arith.constant 0 : index
    %58 = vector.load %arg4[%c0_14, %c0_15, %c0_16, %c0_17] : memref<1x1x8x128xf32, #tpu.memory_space<vmem>>, vector<1x1x8x128xf32>
    tpu.vector_store %arg4[%c0_14, %c0_15, %c0_16, %c0_17], %57 {strides = array<i32>} : memref<1x1x8x128xf32, #tpu.memory_space<vmem>>, vector<1x1x8x128xf32>,
    return
  }
  func.func @transform_0(%arg0: i32, %arg1: i32) -> (i32, i32, i32) {
    %c0_i32 = arith.constant 0 : i32
    %c0_i32_0 = arith.constant 0 : i32
    return %c0_i32, %arg0, %arg1 : i32, i32, i32
  }
  func.func @transform_1(%arg0: i32, %arg1: i32) -> (i32, i32) {
    %c0_i32 = arith.constant 0 : i32
    return %arg0, %arg1 : i32, i32
  }
  func.func @transform_2(%arg0: i32, %arg1: i32) -> (i32, i32, i32, i32) {
    %c0_i32 = arith.constant 0 : i32
    %c0_i32_0 = arith.constant 0 : i32
    %c0_i32_1 = arith.constant 0 : i32
    return %arg0, %arg1, %c0_i32, %c0_i32_0 : i32, i32, i32, i32
  }
}

</mosaic_0001>

<llo_original>
// kernel: tpu_custom_call.1
$region0: #{tpu_custom_call.1}
  #allocation0 [shape = 'u32[]', space=smem, size = 0x4, offset = 0x4, fixed_abs, tag = 'smem constant byte address 0x4 - core index']
  #allocation1 [shape = 'u32[144,128]{1,0:T(1,128)}', space=vmem, size = 0x12000, scoped, tag = 'internal scratch']
  %s0 = inlined_call_operand.hbm [shape: f32[5,2,8], index: 0, kind: input, shape index: {}]
  %s1 = inlined_call_operand.vmem [shape: s32[2,8], index: 1, kind: input, shape index: {}]
  %s2 = inlined_call_operand.hbm [shape: f32[1,1,8,128], index: 2, kind: output, shape index: {}]
  %s3 = sld [smem:[#allocation0]]
  $region22: #{tpu_custom_call.1} parent=0
    _
  %s5 = ssub.s32 1, %s3
  %s6 = scalar_select 0, %s5, %s3
  $region1: #{tpu_custom_call.1} parent=0
    #allocation2 [shape = 'u8[5120]{0}', space=vmem, size = 0x1400, scoped, tag = 'input window, operand 0, single buffered']
    #allocation3 [shape = 's32[1]{0}', space=sflag, size = 0x4, scoped, tag = 'scoped memory for tpu_custom_call.1']
    #allocation4 [shape = 's32[1]{0}', space=sflag, size = 0x4, scoped, tag = 'scoped memory for tpu_custom_call.1']
    #allocation5 [shape = 'u8[4096]{0}', space=vmem, size = 0x1000, scoped, tag = 'output window, operand 0, single buffered']
    %7 = vsyncpa [#allocation3], 0
    %8 = vsyncpa [#allocation4], 0
    // Predicated region
    $region2: #{tpu_custom_call.1} parent=1 // pred_check
      _
    $region3: #{tpu_custom_call.1} parent=1 // pred_check_branch
      %10 = sbr.rel (0) target = $region5
    $region4: #{tpu_custom_call.1} parent=1 // pred_region
      %s12 = ssub.s32 160, 160
      %13 = vsyncadd [#allocation3], %s12
      %s14 = sshll.u32 [#allocation2], 4
      %s15 = int_to_ptr.vmem [resolvable:$true] %s14
      %20 = dma.hbm_to_vmem [thread:$0]  %s0, 160, %s15, [#allocation3], 32, 32, 2
    $region5: #{tpu_custom_call.1} parent=1 // pred_fallthru
      _
    // Predicated region
    $region6: #{tpu_custom_call.1} parent=1 // pred_check
      _
    $region7: #{tpu_custom_call.1} parent=1 // pred_check_branch
      %22 = sbr.rel (0) target = $region9
    $region8: #{tpu_custom_call.1} parent=1 // pred_region
      _
    $region9: #{tpu_custom_call.1} parent=1 // pred_fallthru
      _
    // Predicated region
    $region10: #{tpu_custom_call.1} parent=1 // pred_check
      _
    $region11: #{tpu_custom_call.1} parent=1 // pred_check_branch
      %24 = sbr.rel (0) target = $region13
    $region12: #{tpu_custom_call.1} parent=1 // pred_region
      %25 = dma.done [#allocation3], 160
    $region13: #{tpu_custom_call.1} parent=1 // pred_fallthru
      _
    %v26 = vld [vmem:[%s1] sm:$0x3]
    %v27 = vld [vmem:[#allocation2] sm:$0x3]
    %v28 = vadd.f32 %v27, 0.0
    %vm29 = vcmp.le.s32.totalorder %v26, 0
    %v30 = vsel %vm29, 1, 0
    %v31 = vcvt.s32.f32 %v30
    %v32 = vsub.f32 %v28, %v31
    %v33 = vand.u32 2147483647, %v32
    %v34 = vadd.f32 %v33, 0.0
    %s35 = scalar_lea.vmem [#allocation2], 2
    %v36 = vld [vmem:[%s35] sm:$0x3]
    %v37 = vadd.f32 %v28, %v36
    %vm38 = vcmp.le.s32.totalorder %v26, 1
    %v39 = vsel %vm38, 1, 0
    %v40 = vcvt.s32.f32 %v39
    %v41 = vsub.f32 %v37, %v40
    %v42 = vand.u32 2147483647, %v41
    %v43 = vadd.f32 %v34, %v42
    %s44 = scalar_lea.vmem [#allocation2], 4
    %v45 = vld [vmem:[%s44] sm:$0x3]
    %v46 = vadd.f32 %v37, %v45
    %vm47 = vcmp.le.s32.totalorder %v26, 2
    %v48 = vsel %vm47, 1, 0
    %v49 = vcvt.s32.f32 %v48
    %v50 = vsub.f32 %v46, %v49
    %v51 = vand.u32 2147483647, %v50
    %v52 = vadd.f32 %v43, %v51
    %s53 = scalar_lea.vmem [#allocation2], 6
    %v54 = vld [vmem:[%s53] sm:$0x3]
    %v55 = vadd.f32 %v46, %v54
    %vm56 = vcmp.le.s32.totalorder %v26, 3
    %v57 = vsel %vm56, 1, 0
    %v58 = vcvt.s32.f32 %v57
    %v59 = vsub.f32 %v55, %v58
    %v60 = vand.u32 2147483647, %v59
    %v61 = vadd.f32 %v52, %v60
    %s62 = scalar_lea.vmem [#allocation2], 8
    %v63 = vld [vmem:[%s62] sm:$0x3]
    %v64 = vadd.f32 %v55, %v63
    %vm65 = vcmp.le.s32.totalorder %v26, 4
    %v66 = vsel %vm65, 1, 0
    %v67 = vcvt.s32.f32 %v66
    %v68 = vsub.f32 %v64, %v67
    %v69 = vand.u32 2147483647, %v68
    %v70 = vadd.f32 %v61, %v69
    %vm71 = vcmask 58368
    %v72 = vsel %vm71, %v70, 0.0
    %73 = vadd.xlane.f32.xlu0 %v72
    %v74 = vpop.xlane.xlu0 %73
    %v75 = vrot.slane %v74, 4
    %v76 = vadd.f32 %v74, %v75
    %v77 = vrot.slane %v76, 2
    %v78 = vadd.f32 %v76, %v77
    %v79 = vrot.slane %v78, 1
    %v80 = vadd.f32 %v78, %v79
    %s81 = vtos %v80
    %v82 = vstv %s81
    %83 = vst [vmem:[#allocation5] sm:$0xff] %v82
    // Predicated region
    $region14: #{tpu_custom_call.1} parent=1 // pred_check
      _
    $region15: #{tpu_custom_call.1} parent=1 // pred_check_branch
      %85 = sbr.rel (0) target = $region17
    $region16: #{tpu_custom_call.1} parent=1 // pred_region
      %s87 = ssub.s32 128, 128
      %88 = vsyncadd [#allocation4], %s87
      %s90 = sshll.u32 [#allocation5], 4
      %s91 = int_to_ptr.vmem [resolvable:$true] %s90
      %93 = dma.vmem_to_hbm [thread:$0]  %s91, 128, %s2, [#allocation4]
    $region17: #{tpu_custom_call.1} parent=1 // pred_fallthru
      _
    // Predicated region
    $region18: #{tpu_custom_call.1} parent=1 // pred_check
      _
    $region19: #{tpu_custom_call.1} parent=1 // pred_check_branch
      %95 = sbr.rel (0) target = $region21
    $region20: #{tpu_custom_call.1} parent=1 // pred_region
      %96 = dma.done [#allocation4], 128
    $region21: #{tpu_custom_call.1} parent=1 // pred_fallthru
      _
    %97 = vsyncpa [#allocation3], 1
    %98 = vsyncpa [#allocation4], 1

</llo_original>
